<compile_context>
chip_gen: v6e
topology: v6e:2x2x1
jax: 0.10.0
libtpu: 0.0.40
codegen_flags: <defaults>
</compile_context>

<pallas_src>
import functools
import math

import jax
import jax.numpy as jnp
from jax.experimental import pallas as pl
from jax.experimental.pallas import tpu as pltpu  # noqa: F401  (imported per instructions)

# ---- module hyperparameters (scaled down, consistent with the module structure) ----
C_IN = 64          # input_size
F = 32             # n_feats
K = 3              # conv kernel size
STRIDE = 2
MAX_SEQ_LEN = 64

# ---- example problem sizes (small; batch folds into matmul rows) ----
BATCH = 4
SEQ = 16
T1 = (SEQ - K) // STRIDE + 1      # rows after conv1
T2 = (T1 - K) // STRIDE + 1       # rows after conv2


# ----------------------------- Pallas kernel ------------------------------------
def _audio_embedder_kernel(x_ref, p_ref, out_ref, *, batch, seq):
    t1 = (seq - K) // STRIDE + 1
    t2 = (t1 - K) // STRIDE + 1

    # Static row offsets into the packed parameter slab (rows, F).
    w_in_off = 0
    wc1_off = w_in_off + C_IN
    wc2_off = wc1_off + K * F
    pe_off = wc2_off + K * F
    b_off = pe_off + seq

    w_in = p_ref[w_in_off:w_in_off + C_IN, :]          # (C_IN, F)
    b_in = p_ref[b_off + 0:b_off + 1, :]               # (1, F)
    b_c1 = p_ref[b_off + 1:b_off + 2, :]
    b_c2 = p_ref[b_off + 2:b_off + 3, :]

    # ---- conv1 taps, computed straight from strided input reads ----------------
    # Stride-2 row selection commutes with the Linear / ReLU / +PE, so each tap's
    # activations come directly from strided reads of x and PE (no scratch h).
    def tap1(k):
        pe_k = p_ref[pl.ds(pe_off + k, t1, stride=STRIDE), :]             # (t1, F)
        xk = jnp.concatenate(
            [x_ref[pl.ds(b * seq + k, t1, stride=STRIDE), :] for b in range(batch)],
            axis=0)                                                        # (B*t1, C_IN)
        h = jnp.dot(xk, w_in, preferred_element_type=jnp.float32) + b_in
        h = jnp.maximum(h, 0.0)
        return h + jnp.concatenate([pe_k] * batch, axis=0)                 # (B*t1, F)

    def wc1(k):  # tap-k weight block (F_in, F_out)
        return p_ref[wc1_off + k * F: wc1_off + (k + 1) * F, :]

    # Single-expression sum of dots (no explicit accumulator init / add chain).
    pre1 = (jnp.dot(tap1(0), wc1(0), preferred_element_type=jnp.float32)
            + jnp.dot(tap1(1), wc1(1), preferred_element_type=jnp.float32)
            + jnp.dot(tap1(2), wc1(2), preferred_element_type=jnp.float32))
    h1 = jnp.maximum(pre1 + b_c1, 0.0)                                     # (B*t1, F)

    # ---- conv2 taps: static unit-row slices of the in-register h1 value --------
    def tap2(k):
        rows = [h1[b * t1 + k + STRIDE * o: b * t1 + k + STRIDE * o + 1, :]
                for b in range(batch) for o in range(t2)]
        return jnp.concatenate(rows, axis=0)                               # (B*t2, F)

    def wc2(k):
        return p_ref[wc2_off + k * F: wc2_off + (k + 1) * F, :]

    pre2 = (jnp.dot(tap2(0), wc2(0), preferred_element_type=jnp.float32)
            + jnp.dot(tap2(1), wc2(1), preferred_element_type=jnp.float32)
            + jnp.dot(tap2(2), wc2(2), preferred_element_type=jnp.float32))
    out_ref[...] = jnp.maximum(pre2 + b_c2, 0.0)                           # (B*t2, F)


def audio_embedder_pallas(x, p_slab):
    B, T, _ = x.shape
    t1 = (T - K) // STRIDE + 1
    t2 = (t1 - K) // STRIDE + 1
    kernel = functools.partial(_audio_embedder_kernel, batch=B, seq=T)
    # Whole problem (<100 KB) fits in VMEM: grid-less single invocation,
    # two dense HBM->VMEM DMAs (x and the packed parameter slab).
    out2d = pl.pallas_call(
        kernel,
        out_shape=jax.ShapeDtypeStruct((B * t2, F), jnp.float32),
    )(x.reshape(B * T, C_IN), p_slab)
    return out2d.reshape(B, t2, F)


# ------------------------- parameters (PyTorch layout) ---------------------------
def init_params(rng):
    def nrm(k, shape, scale=0.1):
        return scale * jax.random.normal(k, shape, jnp.float32)

    ks = iter(jax.random.split(rng, 6))
    return {
        "W_in": nrm(next(ks), (F, C_IN)), "b_in": nrm(next(ks), (F,)),
        "c1_w": nrm(next(ks), (F, F, K)), "c1_b": nrm(next(ks), (F,)),
        "c2_w": nrm(next(ks), (F, F, K)), "c2_b": nrm(next(ks), (F,)),
    }


def make_pe(max_len, d_model):
    position = jnp.arange(max_len, dtype=jnp.float32)[:, None]
    div_term = jnp.exp(jnp.arange(0, d_model, 2, dtype=jnp.float32)
                       * (-math.log(10000.0) / d_model))
    pe = jnp.zeros((max_len, d_model), jnp.float32)
    pe = pe.at[:, 0::2].set(jnp.sin(position * div_term))
    pe = pe.at[:, 1::2].set(jnp.cos(position * div_term))
    return pe


def pack_params(p, pe, seq_len):
    """Pack every parameter into ONE f32 slab (rows, F) == one HBM->VMEM DMA.

    Row layout: [ W_in^T (C_IN) | conv1 taps (K*F) | conv2 taps (K*F) |
                  PE[:seq] (seq) | b_in, b_c1, b_c2 (3) ]
    Conv weights are tap-major: row (k*F + ic), col oc == conv_w[oc, ic, k].
    """
    w_in_t = p["W_in"].T                                     # (C_IN, F)
    wc1 = p["c1_w"].transpose(2, 1, 0).reshape(K * F, F)     # (K*F_in, F_out)
    wc2 = p["c2_w"].transpose(2, 1, 0).reshape(K * F, F)
    pe_rows = pe[:seq_len]                                   # (seq, F)
    biases = jnp.stack([p["b_in"], p["c1_b"], p["c2_b"]])    # (3, F)
    return jnp.concatenate([w_in_t, wc1, wc2, pe_rows, biases],
                           axis=0).astype(jnp.float32)


# --------------------------- pure-JAX reference ----------------------------------
def ref_forward(p, pe, x):
    hp = jax.lax.Precision.HIGHEST
    h = jnp.einsum("btc,fc->btf", x, p["W_in"], precision=hp) + p["b_in"]
    h = jnp.maximum(h, 0.0)
    h = h + pe[: x.shape[1]][None]
    z = jnp.transpose(h, (0, 2, 1))                          # (B, F, T)
    for wname, bname in (("c1_w", "c1_b"), ("c2_w", "c2_b")):
        z = jax.lax.conv_general_dilated(
            z, p[wname], (STRIDE,), "VALID",
            dimension_numbers=("NCH", "OIH", "NCH"), precision=hp)
        z = jnp.maximum(z + p[bname][None, :, None], 0.0)
    return jnp.transpose(z, (0, 2, 1))                       # (B, T2, F)


# ------------------------------------ main ---------------------------------------
if __name__ == "__main__":
    rng = jax.random.PRNGKey(0)
    kx, kp = jax.random.split(rng)
    x = jax.random.normal(kx, (BATCH, SEQ, C_IN), jnp.float32)

    params = init_params(kp)
    pe = make_pe(MAX_SEQ_LEN, F)
    p_slab = pack_params(params, pe, SEQ)

    out = audio_embedder_pallas(x, p_slab)
    out = jax.block_until_ready(out)

    ref = ref_forward(params, pe, x)
    assert out.shape == ref.shape == (BATCH, T2, F), (out.shape, ref.shape)
    err = float(jnp.max(jnp.abs(out - ref)))
    # f32 kernel vs f32 Precision.HIGHEST reference: tolerance covers the TPU MXU's
    # default f32 matmul pass count; an indexing bug would produce O(0.3-1) errors.
    assert err < 3e-2, f"max abs error vs reference: {err}"
    print("KERNEL_OK")
</pallas_src>

<mosaic_0001>
module attributes {stable_mosaic.version = 11 : i64} {
  func.func @_audio_embedder_kernel(%arg0: memref<64x64xf32, #tpu.memory_space<vmem>>, %arg1: memref<275x32xf32, #tpu.memory_space<vmem>>, %arg2: memref<12x32xf32, #tpu.memory_space<vmem>>) attributes {dimension_semantics = [], scalar_prefetch = 0 : i64, scratch_operands = 0 : i64, tpu.core_type = #tpu.core_type<tc>} {
    %c0 = arith.constant 0 : index
    %c0_0 = arith.constant 0 : index
    %0 = vector.load %arg1[%c0, %c0_0] : memref<275x32xf32, #tpu.memory_space<vmem>>, vector<64x32xf32>
    %c272 = arith.constant 272 : index
    %c0_1 = arith.constant 0 : index
    %1 = vector.load %arg1[%c272, %c0_1] : memref<275x32xf32, #tpu.memory_space<vmem>>, vector<1x32xf32>
    %c273 = arith.constant 273 : index
    %c0_2 = arith.constant 0 : index
    %2 = vector.load %arg1[%c273, %c0_2] : memref<275x32xf32, #tpu.memory_space<vmem>>, vector<1x32xf32>
    %c274 = arith.constant 274 : index
    %c0_3 = arith.constant 0 : index
    %3 = vector.load %arg1[%c274, %c0_3] : memref<275x32xf32, #tpu.memory_space<vmem>>, vector<1x32xf32>
    %c256 = arith.constant 256 : index
    %c0_4 = arith.constant 0 : index
    %4 = tpu.strided_load %arg1[%c256, %c0_4] {strides = array<i32: 2, 1>} : memref<275x32xf32, #tpu.memory_space<vmem>>, vector<7x32xf32>
    %c0_5 = arith.constant 0 : index
    %c0_6 = arith.constant 0 : index
    %5 = tpu.strided_load %arg0[%c0_5, %c0_6] {strides = array<i32: 2, 1>} : memref<64x64xf32, #tpu.memory_space<vmem>>, vector<7x64xf32>
    %c16 = arith.constant 16 : index
    %c0_7 = arith.constant 0 : index
    %6 = tpu.strided_load %arg0[%c16, %c0_7] {strides = array<i32: 2, 1>} : memref<64x64xf32, #tpu.memory_space<vmem>>, vector<7x64xf32>
    %c32 = arith.constant 32 : index
    %c0_8 = arith.constant 0 : index
    %7 = tpu.strided_load %arg0[%c32, %c0_8] {strides = array<i32: 2, 1>} : memref<64x64xf32, #tpu.memory_space<vmem>>, vector<7x64xf32>
    %c48 = arith.constant 48 : index
    %c0_9 = arith.constant 0 : index
    %8 = tpu.strided_load %arg0[%c48, %c0_9] {strides = array<i32: 2, 1>} : memref<64x64xf32, #tpu.memory_space<vmem>>, vector<7x64xf32>
    %9 = tpu.concatenate %5, %6, %7, %8 in 0 : vector<7x64xf32>, vector<7x64xf32>, vector<7x64xf32>, vector<7x64xf32> -> vector<28x64xf32>
    %cst = arith.constant dense<0.000000e+00> : vector<28x32xf32>
    %10 = tpu.matmul %9, %0, %cst {dimension_numbers = #tpu.dot_dimension_numbers<[1], [0], [0], [1], [0, 0, 1, 1], [], []>} : vector<28x64xf32>, vector<64x32xf32>, vector<28x32xf32> -> vector<28x32xf32>
    %11 = vector.broadcast %1 : vector<1x32xf32> to vector<28x32xf32>
    %12 = arith.addf %10, %11 : vector<28x32xf32>
    %cst_10 = arith.constant 0.000000e+00 : f32
    %13 = vector.broadcast %cst_10 : f32 to vector<28x32xf32>
    %14 = arith.maximumf %12, %13 : vector<28x32xf32>
    %15 = tpu.concatenate %4, %4, %4, %4 in 0 : vector<7x32xf32>, vector<7x32xf32>, vector<7x32xf32>, vector<7x32xf32> -> vector<28x32xf32>
    %16 = arith.addf %14, %15 : vector<28x32xf32>
    %c64 = arith.constant 64 : index
    %c0_11 = arith.constant 0 : index
    %17 = vector.load %arg1[%c64, %c0_11] : memref<275x32xf32, #tpu.memory_space<vmem>>, vector<32x32xf32>
    %cst_12 = arith.constant dense<0.000000e+00> : vector<28x32xf32>
    %18 = tpu.matmul %16, %17, %cst_12 {dimension_numbers = #tpu.dot_dimension_numbers<[1], [0], [0], [1], [0, 0, 1, 1], [], []>} : vector<28x32xf32>, vector<32x32xf32>, vector<28x32xf32> -> vector<28x32xf32>
    %c257 = arith.constant 257 : index
    %c0_13 = arith.constant 0 : index
    %19 = tpu.strided_load %arg1[%c257, %c0_13] {strides = array<i32: 2, 1>} : memref<275x32xf32, #tpu.memory_space<vmem>>, vector<7x32xf32>
    %c1 = arith.constant 1 : index
    %c0_14 = arith.constant 0 : index
    %20 = tpu.strided_load %arg0[%c1, %c0_14] {strides = array<i32: 2, 1>} : memref<64x64xf32, #tpu.memory_space<vmem>>, vector<7x64xf32>
    %c17 = arith.constant 17 : index
    %c0_15 = arith.constant 0 : index
    %21 = tpu.strided_load %arg0[%c17, %c0_15] {strides = array<i32: 2, 1>} : memref<64x64xf32, #tpu.memory_space<vmem>>, vector<7x64xf32>
    %c33 = arith.constant 33 : index
    %c0_16 = arith.constant 0 : index
    %22 = tpu.strided_load %arg0[%c33, %c0_16] {strides = array<i32: 2, 1>} : memref<64x64xf32, #tpu.memory_space<vmem>>, vector<7x64xf32>
    %c49 = arith.constant 49 : index
    %c0_17 = arith.constant 0 : index
    %23 = tpu.strided_load %arg0[%c49, %c0_17] {strides = array<i32: 2, 1>} : memref<64x64xf32, #tpu.memory_space<vmem>>, vector<7x64xf32>
    %24 = tpu.concatenate %20, %21, %22, %23 in 0 : vector<7x64xf32>, vector<7x64xf32>, vector<7x64xf32>, vector<7x64xf32> -> vector<28x64xf32>
    %cst_18 = arith.constant dense<0.000000e+00> : vector<28x32xf32>
    %25 = tpu.matmul %24, %0, %cst_18 {dimension_numbers = #tpu.dot_dimension_numbers<[1], [0], [0], [1], [0, 0, 1, 1], [], []>} : vector<28x64xf32>, vector<64x32xf32>, vector<28x32xf32> -> vector<28x32xf32>
    %26 = vector.broadcast %1 : vector<1x32xf32> to vector<28x32xf32>
    %27 = arith.addf %25, %26 : vector<28x32xf32>
    %cst_19 = arith.constant 0.000000e+00 : f32
    %28 = vector.broadcast %cst_19 : f32 to vector<28x32xf32>
    %29 = arith.maximumf %27, %28 : vector<28x32xf32>
    %30 = tpu.concatenate %19, %19, %19, %19 in 0 : vector<7x32xf32>, vector<7x32xf32>, vector<7x32xf32>, vector<7x32xf32> -> vector<28x32xf32>
    %31 = arith.addf %29, %30 : vector<28x32xf32>
    %c96 = arith.constant 96 : index
    %c0_20 = arith.constant 0 : index
    %32 = vector.load %arg1[%c96, %c0_20] : memref<275x32xf32, #tpu.memory_space<vmem>>, vector<32x32xf32>
    %cst_21 = arith.constant dense<0.000000e+00> : vector<28x32xf32>
    %33 = tpu.matmul %31, %32, %cst_21 {dimension_numbers = #tpu.dot_dimension_numbers<[1], [0], [0], [1], [0, 0, 1, 1], [], []>} : vector<28x32xf32>, vector<32x32xf32>, vector<28x32xf32> -> vector<28x32xf32>
    %34 = arith.addf %18, %33 : vector<28x32xf32>
    %c258 = arith.constant 258 : index
    %c0_22 = arith.constant 0 : index
    %35 = tpu.strided_load %arg1[%c258, %c0_22] {strides = array<i32: 2, 1>} : memref<275x32xf32, #tpu.memory_space<vmem>>, vector<7x32xf32>
    %c2 = arith.constant 2 : index
    %c0_23 = arith.constant 0 : index
    %36 = tpu.strided_load %arg0[%c2, %c0_23] {strides = array<i32: 2, 1>} : memref<64x64xf32, #tpu.memory_space<vmem>>, vector<7x64xf32>
    %c18 = arith.constant 18 : index
    %c0_24 = arith.constant 0 : index
    %37 = tpu.strided_load %arg0[%c18, %c0_24] {strides = array<i32: 2, 1>} : memref<64x64xf32, #tpu.memory_space<vmem>>, vector<7x64xf32>
    %c34 = arith.constant 34 : index
    %c0_25 = arith.constant 0 : index
    %38 = tpu.strided_load %arg0[%c34, %c0_25] {strides = array<i32: 2, 1>} : memref<64x64xf32, #tpu.memory_space<vmem>>, vector<7x64xf32>
    %c50 = arith.constant 50 : index
    %c0_26 = arith.constant 0 : index
    %39 = tpu.strided_load %arg0[%c50, %c0_26] {strides = array<i32: 2, 1>} : memref<64x64xf32, #tpu.memory_space<vmem>>, vector<7x64xf32>
    %40 = tpu.concatenate %36, %37, %38, %39 in 0 : vector<7x64xf32>, vector<7x64xf32>, vector<7x64xf32>, vector<7x64xf32> -> vector<28x64xf32>
    %cst_27 = arith.constant dense<0.000000e+00> : vector<28x32xf32>
    %41 = tpu.matmul %40, %0, %cst_27 {dimension_numbers = #tpu.dot_dimension_numbers<[1], [0], [0], [1], [0, 0, 1, 1], [], []>} : vector<28x64xf32>, vector<64x32xf32>, vector<28x32xf32> -> vector<28x32xf32>
    %42 = vector.broadcast %1 : vector<1x32xf32> to vector<28x32xf32>
    %43 = arith.addf %41, %42 : vector<28x32xf32>
    %cst_28 = arith.constant 0.000000e+00 : f32
    %44 = vector.broadcast %cst_28 : f32 to vector<28x32xf32>
    %45 = arith.maximumf %43, %44 : vector<28x32xf32>
    %46 = tpu.concatenate %35, %35, %35, %35 in 0 : vector<7x32xf32>, vector<7x32xf32>, vector<7x32xf32>, vector<7x32xf32> -> vector<28x32xf32>
    %47 = arith.addf %45, %46 : vector<28x32xf32>
    %c128 = arith.constant 128 : index
    %c0_29 = arith.constant 0 : index
    %48 = vector.load %arg1[%c128, %c0_29] : memref<275x32xf32, #tpu.memory_space<vmem>>, vector<32x32xf32>
    %cst_30 = arith.constant dense<0.000000e+00> : vector<28x32xf32>
    %49 = tpu.matmul %47, %48, %cst_30 {dimension_numbers = #tpu.dot_dimension_numbers<[1], [0], [0], [1], [0, 0, 1, 1], [], []>} : vector<28x32xf32>, vector<32x32xf32>, vector<28x32xf32> -> vector<28x32xf32>
    %50 = arith.addf %34, %49 : vector<28x32xf32>
    %51 = vector.broadcast %2 : vector<1x32xf32> to vector<28x32xf32>
    %52 = arith.addf %50, %51 : vector<28x32xf32>
    %cst_31 = arith.constant 0.000000e+00 : f32
    %53 = vector.broadcast %cst_31 : f32 to vector<28x32xf32>
    %54 = arith.maximumf %52, %53 : vector<28x32xf32>
    %55 = vector.extract_strided_slice %54 {offsets = [0, 0], sizes = [1, 32], strides = [1, 1]} : vector<28x32xf32> to vector<1x32xf32>
    %56 = vector.extract_strided_slice %54 {offsets = [2, 0], sizes = [1, 32], strides = [1, 1]} : vector<28x32xf32> to vector<1x32xf32>
    %57 = vector.extract_strided_slice %54 {offsets = [4, 0], sizes = [1, 32], strides = [1, 1]} : vector<28x32xf32> to vector<1x32xf32>
    %58 = vector.extract_strided_slice %54 {offsets = [7, 0], sizes = [1, 32], strides = [1, 1]} : vector<28x32xf32> to vector<1x32xf32>
    %59 = vector.extract_strided_slice %54 {offsets = [9, 0], sizes = [1, 32], strides = [1, 1]} : vector<28x32xf32> to vector<1x32xf32>
    %60 = vector.extract_strided_slice %54 {offsets = [11, 0], sizes = [1, 32], strides = [1, 1]} : vector<28x32xf32> to vector<1x32xf32>
    %61 = vector.extract_strided_slice %54 {offsets = [14, 0], sizes = [1, 32], strides = [1, 1]} : vector<28x32xf32> to vector<1x32xf32>
    %62 = vector.extract_strided_slice %54 {offsets = [16, 0], sizes = [1, 32], strides = [1, 1]} : vector<28x32xf32> to vector<1x32xf32>
    %63 = vector.extract_strided_slice %54 {offsets = [18, 0], sizes = [1, 32], strides = [1, 1]} : vector<28x32xf32> to vector<1x32xf32>
    %64 = vector.extract_strided_slice %54 {offsets = [21, 0], sizes = [1, 32], strides = [1, 1]} : vector<28x32xf32> to vector<1x32xf32>
    %65 = vector.extract_strided_slice %54 {offsets = [23, 0], sizes = [1, 32], strides = [1, 1]} : vector<28x32xf32> to vector<1x32xf32>
    %66 = vector.extract_strided_slice %54 {offsets = [25, 0], sizes = [1, 32], strides = [1, 1]} : vector<28x32xf32> to vector<1x32xf32>
    %67 = tpu.concatenate %55, %56, %57, %58, %59, %60, %61, %62, %63, %64, %65, %66 in 0 : vector<1x32xf32>, vector<1x32xf32>, vector<1x32xf32>, vector<1x32xf32>, vector<1x32xf32>, vector<1x32xf32>, vector<1x32xf32>, vector<1x32xf32>, vector<1x32xf32>, vector<1x32xf32>, vector<1x32xf32>, vector<1x32xf32> -> vector<12x32xf32>
    %c160 = arith.constant 160 : index
    %c0_32 = arith.constant 0 : index
    %68 = vector.load %arg1[%c160, %c0_32] : memref<275x32xf32, #tpu.memory_space<vmem>>, vector<32x32xf32>
    %cst_33 = arith.constant dense<0.000000e+00> : vector<12x32xf32>
    %69 = tpu.matmul %67, %68, %cst_33 {dimension_numbers = #tpu.dot_dimension_numbers<[1], [0], [0], [1], [0, 0, 1, 1], [], []>} : vector<12x32xf32>, vector<32x32xf32>, vector<12x32xf32> -> vector<12x32xf32>
    %70 = vector.extract_strided_slice %54 {offsets = [1, 0], sizes = [1, 32], strides = [1, 1]} : vector<28x32xf32> to vector<1x32xf32>
    %71 = vector.extract_strided_slice %54 {offsets = [3, 0], sizes = [1, 32], strides = [1, 1]} : vector<28x32xf32> to vector<1x32xf32>
    %72 = vector.extract_strided_slice %54 {offsets = [5, 0], sizes = [1, 32], strides = [1, 1]} : vector<28x32xf32> to vector<1x32xf32>
    %73 = vector.extract_strided_slice %54 {offsets = [8, 0], sizes = [1, 32], strides = [1, 1]} : vector<28x32xf32> to vector<1x32xf32>
    %74 = vector.extract_strided_slice %54 {offsets = [10, 0], sizes = [1, 32], strides = [1, 1]} : vector<28x32xf32> to vector<1x32xf32>
    %75 = vector.extract_strided_slice %54 {offsets = [12, 0], sizes = [1, 32], strides = [1, 1]} : vector<28x32xf32> to vector<1x32xf32>
    %76 = vector.extract_strided_slice %54 {offsets = [15, 0], sizes = [1, 32], strides = [1, 1]} : vector<28x32xf32> to vector<1x32xf32>
    %77 = vector.extract_strided_slice %54 {offsets = [17, 0], sizes = [1, 32], strides = [1, 1]} : vector<28x32xf32> to vector<1x32xf32>
    %78 = vector.extract_strided_slice %54 {offsets = [19, 0], sizes = [1, 32], strides = [1, 1]} : vector<28x32xf32> to vector<1x32xf32>
    %79 = vector.extract_strided_slice %54 {offsets = [22, 0], sizes = [1, 32], strides = [1, 1]} : vector<28x32xf32> to vector<1x32xf32>
    %80 = vector.extract_strided_slice %54 {offsets = [24, 0], sizes = [1, 32], strides = [1, 1]} : vector<28x32xf32> to vector<1x32xf32>
    %81 = vector.extract_strided_slice %54 {offsets = [26, 0], sizes = [1, 32], strides = [1, 1]} : vector<28x32xf32> to vector<1x32xf32>
    %82 = tpu.concatenate %70, %71, %72, %73, %74, %75, %76, %77, %78, %79, %80, %81 in 0 : vector<1x32xf32>, vector<1x32xf32>, vector<1x32xf32>, vector<1x32xf32>, vector<1x32xf32>, vector<1x32xf32>, vector<1x32xf32>, vector<1x32xf32>, vector<1x32xf32>, vector<1x32xf32>, vector<1x32xf32>, vector<1x32xf32> -> vector<12x32xf32>
    %c192 = arith.constant 192 : index
    %c0_34 = arith.constant 0 : index
    %83 = vector.load %arg1[%c192, %c0_34] : memref<275x32xf32, #tpu.memory_space<vmem>>, vector<32x32xf32>
    %cst_35 = arith.constant dense<0.000000e+00> : vector<12x32xf32>
    %84 = tpu.matmul %82, %83, %cst_35 {dimension_numbers = #tpu.dot_dimension_numbers<[1], [0], [0], [1], [0, 0, 1, 1], [], []>} : vector<12x32xf32>, vector<32x32xf32>, vector<12x32xf32> -> vector<12x32xf32>
    %85 = arith.addf %69, %84 : vector<12x32xf32>
    %86 = vector.extract_strided_slice %54 {offsets = [2, 0], sizes = [1, 32], strides = [1, 1]} : vector<28x32xf32> to vector<1x32xf32>
    %87 = vector.extract_strided_slice %54 {offsets = [4, 0], sizes = [1, 32], strides = [1, 1]} : vector<28x32xf32> to vector<1x32xf32>
    %88 = vector.extract_strided_slice %54 {offsets = [6, 0], sizes = [1, 32], strides = [1, 1]} : vector<28x32xf32> to vector<1x32xf32>
    %89 = vector.extract_strided_slice %54 {offsets = [9, 0], sizes = [1, 32], strides = [1, 1]} : vector<28x32xf32> to vector<1x32xf32>
    %90 = vector.extract_strided_slice %54 {offsets = [11, 0], sizes = [1, 32], strides = [1, 1]} : vector<28x32xf32> to vector<1x32xf32>
    %91 = vector.extract_strided_slice %54 {offsets = [13, 0], sizes = [1, 32], strides = [1, 1]} : vector<28x32xf32> to vector<1x32xf32>
    %92 = vector.extract_strided_slice %54 {offsets = [16, 0], sizes = [1, 32], strides = [1, 1]} : vector<28x32xf32> to vector<1x32xf32>
    %93 = vector.extract_strided_slice %54 {offsets = [18, 0], sizes = [1, 32], strides = [1, 1]} : vector<28x32xf32> to vector<1x32xf32>
    %94 = vector.extract_strided_slice %54 {offsets = [20, 0], sizes = [1, 32], strides = [1, 1]} : vector<28x32xf32> to vector<1x32xf32>
    %95 = vector.extract_strided_slice %54 {offsets = [23, 0], sizes = [1, 32], strides = [1, 1]} : vector<28x32xf32> to vector<1x32xf32>
    %96 = vector.extract_strided_slice %54 {offsets = [25, 0], sizes = [1, 32], strides = [1, 1]} : vector<28x32xf32> to vector<1x32xf32>
    %97 = vector.extract_strided_slice %54 {offsets = [27, 0], sizes = [1, 32], strides = [1, 1]} : vector<28x32xf32> to vector<1x32xf32>
    %98 = tpu.concatenate %86, %87, %88, %89, %90, %91, %92, %93, %94, %95, %96, %97 in 0 : vector<1x32xf32>, vector<1x32xf32>, vector<1x32xf32>, vector<1x32xf32>, vector<1x32xf32>, vector<1x32xf32>, vector<1x32xf32>, vector<1x32xf32>, vector<1x32xf32>, vector<1x32xf32>, vector<1x32xf32>, vector<1x32xf32> -> vector<12x32xf32>
    %c224 = arith.constant 224 : index
    %c0_36 = arith.constant 0 : index
    %99 = vector.load %arg1[%c224, %c0_36] : memref<275x32xf32, #tpu.memory_space<vmem>>, vector<32x32xf32>
    %cst_37 = arith.constant dense<0.000000e+00> : vector<12x32xf32>
    %100 = tpu.matmul %98, %99, %cst_37 {dimension_numbers = #tpu.dot_dimension_numbers<[1], [0], [0], [1], [0, 0, 1, 1], [], []>} : vector<12x32xf32>, vector<32x32xf32>, vector<12x32xf32> -> vector<12x32xf32>
    %101 = arith.addf %85, %100 : vector<12x32xf32>
    %102 = vector.broadcast %3 : vector<1x32xf32> to vector<12x32xf32>
    %103 = arith.addf %101, %102 : vector<12x32xf32>
    %cst_38 = arith.constant 0.000000e+00 : f32
    %104 = vector.broadcast %cst_38 : f32 to vector<12x32xf32>
    %105 = arith.maximumf %103, %104 : vector<12x32xf32>
    %c0_39 = arith.constant 0 : index
    %c0_40 = arith.constant 0 : index
    %106 = vector.load %arg2[%c0_39, %c0_40] : memref<12x32xf32, #tpu.memory_space<vmem>>, vector<12x32xf32>
    tpu.vector_store %arg2[%c0_39, %c0_40], %105 {strides = array<i32>} : memref<12x32xf32, #tpu.memory_space<vmem>>, vector<12x32xf32>,
    return
  }
}

</mosaic_0001>

<llo_original>
// kernel: tpu_custom_call.1
$region0: #{tpu_custom_call.1}
  #allocation0 [shape = 'u32[]', space=smem, size = 0x4, offset = 0x4, fixed_abs, tag = 'smem constant byte address 0x4 - core index']
  #allocation1 [shape = 'u32[144,128]{1,0:T(1,128)}', space=vmem, size = 0x12000, scoped, tag = 'internal scratch']
  %s0 = inlined_call_operand.vmem [shape: f32[64,64], index: 0, kind: input, shape index: {}]
  %s1 = inlined_call_operand.vmem [shape: f32[275,32], index: 1, kind: input, shape index: {}]
  %s2 = inlined_call_operand.hbm [shape: f32[12,32], index: 2, kind: output, shape index: {}]
  %s3 = sld [smem:[#allocation0]]
  $region18: #{tpu_custom_call.1} parent=0
    _
  %s5 = ssub.s32 1, %s3
  %s6 = scalar_select 0, %s5, %s3
  $region1: #{tpu_custom_call.1} parent=0
    #allocation2 [shape = 'u8[8192]{0}', space=vmem, size = 0x2000, scoped, tag = 'output window, operand 0, single buffered']
    #allocation3 [shape = 's32[1]{0}', space=sflag, size = 0x4, scoped, tag = 'scoped memory for tpu_custom_call.1']
    %7 = vsyncpa [#allocation3], 0
    // Predicated region
    $region2: #{tpu_custom_call.1} parent=1 // pred_check
      _
    $region3: #{tpu_custom_call.1} parent=1 // pred_check_branch
      %9 = sbr.rel (0) target = $region5
    $region4: #{tpu_custom_call.1} parent=1 // pred_region
      _
    $region5: #{tpu_custom_call.1} parent=1 // pred_fallthru
      _
    // Predicated region
    $region6: #{tpu_custom_call.1} parent=1 // pred_check
      _
    $region7: #{tpu_custom_call.1} parent=1 // pred_check_branch
      %11 = sbr.rel (0) target = $region9
    $region8: #{tpu_custom_call.1} parent=1 // pred_region
      _
    $region9: #{tpu_custom_call.1} parent=1 // pred_fallthru
      _
    %v12 = vld [vmem:[%s1] sm:$0xff]
    %v13 = vld [vmem:[%s1 + $0x8] sm:$0xff]
    %v14 = vld [vmem:[%s1 + $0x10] sm:$0xff]
    %v15 = vld [vmem:[%s1 + $0x18] sm:$0xff]
    %v16 = vld [vmem:[%s1 + $0x20] sm:$0xff]
    %v17 = vld [vmem:[%s1 + $0x28] sm:$0xff]
    %v18 = vld [vmem:[%s1 + $0x30] sm:$0xff]
    %v19 = vld [vmem:[%s1 + $0x38] sm:$0xff]
    %v20 = vld [vmem:[%s1 + $0x110] sm:$0x1]
    %v21 = vld [vmem:[%s1 + $0x111] sm:$0x1]
    %v22 = vld [vmem:[%s1 + $0x112] sm:$0x1]
    %s23 = scalar_lea.vmem %s1, 256
    %v24 = vld [vmem:[%s23] ss:$2 sm:$0x7f]
    %v25 = vld [vmem:[%s0] ss:$2 sm:$0x7f]
    %s26 = scalar_lea.vmem %s0, 16
    %v27 = vld [vmem:[%s26] ss:$2 sm:$0x7f]
    %s28 = scalar_lea.vmem %s0, 32
    %v29 = vld [vmem:[%s28] ss:$2 sm:$0x7f]
    %s30 = scalar_lea.vmem %s0, 48
    %v31 = vld [vmem:[%s30] ss:$2 sm:$0x7f]
    %v33 = vrot.slane %v27, 1
    %v36 = vrot.slane %v29, 2
    %v39 = vrot.slane %v31, 3
    %vm41 = vcmask 1046528
    %v42 = vsel %vm41, %v25, %v33
    %vm43 = vcmask 1045504
    %v44 = vsel %vm43, %v33, %v36
    %vm45 = vcmask 1044480
    %v46 = vsel %vm45, %v36, %v39
    %v47 = vlaneseq
    %v48 = vshrl.u32 %v47, 7
    %v49 = vsub.s32 0, %v48
    %v50 = vrot.slane %v20, %v49
    %vm51 = vcmask 523264
    %v53 = vsel %vm51, %v42, 0
    %v56 = vsel %vm51, %v44, 0
    %v59 = vsel %vm51, %v46, 0
    %v61 = vsel %vm51, %v39, 0
    %63 = vmatprep.subr.mxu0 0.0
    %64 = vmatpush1.msra.mxu0 0.0
    %65 = vmatprep.subr.mxu0 0.0
    %66 = vmatpush1.msra.mxu0 0.0
    %67 = vmatprep.subr.mxu0 0.0
    %68 = vmatpush1.msra.mxu0 0.0
    %69 = vmatprep.subr.mxu0 0.0
    %70 = vmatpush1.msra.mxu0 0.0
    %71 = vmatprep.subr.mxu0 0.0
    %72 = vmatpush1.msra.mxu0 0.0
    %73 = vmatprep.subr.mxu0 0.0
    %74 = vmatpush1.msra.mxu0 0.0
    %75 = vmatprep.subr.mxu0 0.0
    %76 = vmatpush1.msra.mxu0 0.0
    %77 = vmatprep.subr.mxu0 0.0
    %78 = vmatpush1.msra.mxu0 0.0
    %79 = vmatprep.subr.mxu0 0.0
    %80 = vmatpush1.msra.mxu0 %v19
    %81 = vmatprep.subr.mxu0 0.0
    %82 = vmatpush1.msra.mxu0 %v18
    %83 = vmatprep.subr.mxu0 0.0
    %84 = vmatpush1.msra.mxu0 %v17
    %85 = vmatprep.subr.mxu0 0.0
    %86 = vmatpush1.msra.mxu0 %v16
    %87 = vmatprep.subr.mxu0 0.0
    %88 = vmatpush1.msra.mxu0 %v15
    %89 = vmatprep.subr.mxu0 0.0
    %90 = vmatpush1.msra.mxu0 %v14
    %91 = vmatprep.subr.mxu0 0.0
    %92 = vmatpush1.msra.mxu0 %v13
    %93 = vmatprep.subr.mxu0 0.0
    %94 = vmatpush1.msra.mxu0 %v12
    %95 = vmatprep.subr.mxu0 0.0
    %96 = vmatpush2.msra.mxu0 0.0
    %97 = vmatprep.subr.mxu0 0.0
    %98 = vmatpush2.msra.mxu0 0.0
    %99 = vmatprep.subr.mxu0 0.0
    %100 = vmatpush2.msra.mxu0 0.0
    %101 = vmatprep.subr.mxu0 0.0
    %102 = vmatpush2.msra.mxu0 0.0
    %103 = vmatprep.subr.mxu0 0.0
    %104 = vmatpush2.msra.mxu0 0.0
    %105 = vmatprep.subr.mxu0 0.0
    %106 = vmatpush2.msra.mxu0 0.0
    %107 = vmatprep.subr.mxu0 0.0
    %108 = vmatpush2.msra.mxu0 0.0
    %109 = vmatprep.subr.mxu0 0.0
    %110 = vmatpush2.msra.mxu0 0.0
    %111 = vmatprep.subr.mxu0 0.0
    %112 = vmatpush2.msra.mxu0 0.0
    %113 = vmatprep.subr.mxu0 0.0
    %114 = vmatpush2.msra.mxu0 0.0
    %115 = vmatprep.subr.mxu0 0.0
    %116 = vmatpush2.msra.mxu0 0.0
    %117 = vmatprep.subr.mxu0 0.0
    %118 = vmatpush2.msra.mxu0 0.0
    %119 = vmatprep.subr.mxu0 0.0
    %120 = vmatpush2.msra.mxu0 0.0
    %121 = vmatprep.subr.mxu0 0.0
    %122 = vmatpush2.msra.mxu0 0.0
    %123 = vmatprep.subr.mxu0 0.0
    %124 = vmatpush2.msra.mxu0 0.0
    %125 = vmatprep.subr.mxu0 0.0
    %126 = vmatpush2.msra.mxu0 0.0
    %127 = vmatprep.mubr.f32.mxu0 0.0
    %128 = vmatmul.mubr.f32.gmra.mxu0 %v53
    %v129 = vpop.f32.mrf.mxu0
    %v130 = vadd.f32 %v50, %v129
    %v131 = vpop.f32.mrf.mxu0
    %132 = vmatprep.mubr.f32.mxu0 0.0
    %133 = vmatmul.mubr.f32.gmra.mxu0 %v56
    %v134 = vpop.f32.mrf.mxu0
    %v135 = vadd.f32 %v50, %v134
    %v136 = vpop.f32.mrf.mxu0
    %137 = vmatprep.mubr.f32.mxu0 0.0
    %138 = vmatmul.mubr.f32.gmra.mxu0 %v59
    %v139 = vpop.f32.mrf.mxu0
    %v140 = vadd.f32 %v50, %v139
    %v141 = vpop.f32.mrf.mxu0
    %142 = vmatprep.mubr.f32.mxu0 0.0
    %143 = vmatmul.mubr.f32.gmra.mxu0 %v61
    %v144 = vpop.f32.mrf.mxu0
    %v145 = vadd.f32 %v50, %v144
    %v146 = vpop.f32.mrf.mxu0
    %147 = vdwg.mxu0
    %v148 = vmax.f32 %v130, 0.0
    %v149 = vmax.f32 %v135, 0.0
    %v150 = vmax.f32 %v140, 0.0
    %v151 = vmax.f32 %v145, 0.0
    %v153 = vrot.slane %v24, 1
    %v155 = vrot.slane %v24, 2
    %v157 = vrot.slane %v24, 3
    %v159 = vsel %vm41, %v24, %v153
    %v160 = vsel %vm43, %v153, %v155
    %v161 = vsel %vm45, %v155, %v157
    %v162 = vadd.f32 %v148, %v159
    %v163 = vadd.f32 %v149, %v160
    %v164 = vadd.f32 %v150, %v161
    %v165 = vadd.f32 %v151, %v157
    %v166 = vld [vmem:[%s1 + $0x40] sm:$0xff]
    %v167 = vld [vmem:[%s1 + $0x48] sm:$0xff]
    %v168 = vld [vmem:[%s1 + $0x50] sm:$0xff]
    %v169 = vld [vmem:[%s1 + $0x58] sm:$0xff]
    %s170 = scalar_lea.vmem %s1, 257
    %v171 = vld [vmem:[%s170] ss:$2 sm:$0x7f]
    %s172 = scalar_lea.vmem %s0, 1
    %v173 = vld [vmem:[%s172] ss:$2 sm:$0x7f]
    %s174 = scalar_lea.vmem %s0, 17
    %v175 = vld [vmem:[%s174] ss:$2 sm:$0x7f]
    %s176 = scalar_lea.vmem %s0, 33
    %v177 = vld [vmem:[%s176] ss:$2 sm:$0x7f]
    %s178 = scalar_lea.vmem %s0, 49
    %v179 = vld [vmem:[%s178] ss:$2 sm:$0x7f]
    %v181 = vrot.slane %v175, 1
    %v184 = vrot.slane %v177, 2
    %v187 = vrot.slane %v179, 3
    %v189 = vsel %vm41, %v173, %v181
    %v190 = vsel %vm43, %v181, %v184
    %v191 = vsel %vm45, %v184, %v187
    %v193 = vsel %vm51, %v189, 0
    %v196 = vsel %vm51, %v190, 0
    %v199 = vsel %vm51, %v191, 0
    %v201 = vsel %vm51, %v187, 0
    %203 = vmatprep.subr.mxu0 0.0
    %204 = vmatpush1.msra.mxu0 0.0
    %205 = vmatprep.subr.mxu0 0.0
    %206 = vmatpush1.msra.mxu0 0.0
    %207 = vmatprep.subr.mxu0 0.0
    %208 = vmatpush1.msra.mxu0 0.0
    %209 = vmatprep.subr.mxu0 0.0
    %210 = vmatpush1.msra.mxu0 0.0
    %211 = vmatprep.subr.mxu0 0.0
    %212 = vmatpush1.msra.mxu0 0.0
    %213 = vmatprep.subr.mxu0 0.0
    %214 = vmatpush1.msra.mxu0 0.0
    %215 = vmatprep.subr.mxu0 0.0
    %216 = vmatpush1.msra.mxu0 0.0
    %217 = vmatprep.subr.mxu0 0.0
    %218 = vmatpush1.msra.mxu0 0.0
    %219 = vmatprep.subr.mxu0 0.0
    %220 = vmatpush1.msra.mxu0 %v19
    %221 = vmatprep.subr.mxu0 0.0
    %222 = vmatpush1.msra.mxu0 %v18
    %223 = vmatprep.subr.mxu0 0.0
    %224 = vmatpush1.msra.mxu0 %v17
    %225 = vmatprep.subr.mxu0 0.0
    %226 = vmatpush1.msra.mxu0 %v16
    %227 = vmatprep.subr.mxu0 0.0
    %228 = vmatpush1.msra.mxu0 %v15
    %229 = vmatprep.subr.mxu0 0.0
    %230 = vmatpush1.msra.mxu0 %v14
    %231 = vmatprep.subr.mxu0 0.0
    %232 = vmatpush1.msra.mxu0 %v13
    %233 = vmatprep.subr.mxu0 0.0
    %234 = vmatpush1.msra.mxu0 %v12
    %235 = vmatprep.subr.mxu0 0.0
    %236 = vmatpush2.msra.mxu0 0.0
    %237 = vmatprep.subr.mxu0 0.0
    %238 = vmatpush2.msra.mxu0 0.0
    %239 = vmatprep.subr.mxu0 0.0
    %240 = vmatpush2.msra.mxu0 0.0
    %241 = vmatprep.subr.mxu0 0.0
    %242 = vmatpush2.msra.mxu0 0.0
    %243 = vmatprep.subr.mxu0 0.0
    %244 = vmatpush2.msra.mxu0 0.0
    %245 = vmatprep.subr.mxu0 0.0
    %246 = vmatpush2.msra.mxu0 0.0
    %247 = vmatprep.subr.mxu0 0.0
    %248 = vmatpush2.msra.mxu0 0.0
    %249 = vmatprep.subr.mxu0 0.0
    %250 = vmatpush2.msra.mxu0 0.0
    %251 = vmatprep.subr.mxu0 0.0
    %252 = vmatpush2.msra.mxu0 0.0
    %253 = vmatprep.subr.mxu0 0.0
    %254 = vmatpush2.msra.mxu0 0.0
    %255 = vmatprep.subr.mxu0 0.0
    %256 = vmatpush2.msra.mxu0 0.0
    %257 = vmatprep.subr.mxu0 0.0
    %258 = vmatpush2.msra.mxu0 0.0
    %259 = vmatprep.subr.mxu0 0.0
    %260 = vmatpush2.msra.mxu0 0.0
    %261 = vmatprep.subr.mxu0 0.0
    %262 = vmatpush2.msra.mxu0 0.0
    %263 = vmatprep.subr.mxu0 0.0
    %264 = vmatpush2.msra.mxu0 0.0
    %265 = vmatprep.subr.mxu0 0.0
    %266 = vmatpush2.msra.mxu0 0.0
    %267 = vmatprep.mubr.f32.mxu0 0.0
    %268 = vmatmul.mubr.f32.gmra.mxu0 %v193
    %v269 = vpop.f32.mrf.mxu0
    %v270 = vadd.f32 %v50, %v269
    %v271 = vpop.f32.mrf.mxu0
    %272 = vmatprep.mubr.f32.mxu0 0.0
    %273 = vmatmul.mubr.f32.gmra.mxu0 %v196
    %v274 = vpop.f32.mrf.mxu0
    %v275 = vadd.f32 %v50, %v274
    %v276 = vpop.f32.mrf.mxu0
    %277 = vmatprep.mubr.f32.mxu0 0.0
    %278 = vmatmul.mubr.f32.gmra.mxu0 %v199
    %v279 = vpop.f32.mrf.mxu0
    %v280 = vadd.f32 %v50, %v279
    %v281 = vpop.f32.mrf.mxu0
    %282 = vmatprep.mubr.f32.mxu0 0.0
    %283 = vmatmul.mubr.f32.gmra.mxu0 %v201
    %v284 = vpop.f32.mrf.mxu0
    %v285 = vadd.f32 %v50, %v284
    %v286 = vpop.f32.mrf.mxu0
    %287 = vdwg.mxu0
    %v288 = vmax.f32 %v270, 0.0
    %v289 = vmax.f32 %v275, 0.0
    %v290 = vmax.f32 %v280, 0.0
    %v291 = vmax.f32 %v285, 0.0
    %v293 = vrot.slane %v171, 1
    %v295 = vrot.slane %v171, 2
    %v297 = vrot.slane %v171, 3
    %v299 = vsel %vm41, %v171, %v293
    %v300 = vsel %vm43, %v293, %v295
    %v301 = vsel %vm45, %v295, %v297
    %v302 = vadd.f32 %v288, %v299
    %v303 = vadd.f32 %v289, %v300
    %v304 = vadd.f32 %v290, %v301
    %v305 = vadd.f32 %v291, %v297
    %v306 = vld [vmem:[%s1 + $0x60] sm:$0xff]
    %v307 = vld [vmem:[%s1 + $0x68] sm:$0xff]
    %v308 = vld [vmem:[%s1 + $0x70] sm:$0xff]
    %v309 = vld [vmem:[%s1 + $0x78] sm:$0xff]
    %vm310 = vcmask 261120
    %v312 = vsel %vm310, %v302, 0
    %v315 = vsel %vm310, %v303, 0
    %v318 = vsel %vm310, %v304, 0
    %v321 = vsel %vm310, %v305, 0
    %323 = vmatprep.subr.mxu0 0.0
    %324 = vmatpush1.msra.mxu0 0.0
    %325 = vmatprep.subr.mxu0 0.0
    %326 = vmatpush1.msra.mxu0 0.0
    %327 = vmatprep.subr.mxu0 0.0
    %328 = vmatpush1.msra.mxu0 0.0
    %329 = vmatprep.subr.mxu0 0.0
    %330 = vmatpush1.msra.mxu0 0.0
    %331 = vmatprep.subr.mxu0 0.0
    %332 = vmatpush1.msra.mxu0 0.0
    %333 = vmatprep.subr.mxu0 0.0
    %334 = vmatpush1.msra.mxu0 0.0
    %335 = vmatprep.subr.mxu0 0.0
    %336 = vmatpush1.msra.mxu0 0.0
    %337 = vmatprep.subr.mxu0 0.0
    %338 = vmatpush1.msra.mxu0 0.0
    %339 = vmatprep.subr.mxu0 0.0
    %340 = vmatpush1.msra.mxu0 0.0
    %341 = vmatprep.subr.mxu0 0.0
    %342 = vmatpush1.msra.mxu0 0.0
    %343 = vmatprep.subr.mxu0 0.0
    %344 = vmatpush1.msra.mxu0 0.0
    %345 = vmatprep.subr.mxu0 0.0
    %346 = vmatpush1.msra.mxu0 0.0
    %347 = vmatprep.subr.mxu0 0.0
    %348 = vmatpush1.msra.mxu0 %v309
    %349 = vmatprep.subr.mxu0 0.0
    %350 = vmatpush1.msra.mxu0 %v308
    %351 = vmatprep.subr.mxu0 0.0
    %352 = vmatpush1.msra.mxu0 %v307
    %353 = vmatprep.subr.mxu0 0.0
    %354 = vmatpush1.msra.mxu0 %v306
    %355 = vmatprep.subr.mxu0 0.0
    %356 = vmatpush2.msra.mxu0 0.0
    %357 = vmatprep.subr.mxu0 0.0
    %358 = vmatpush2.msra.mxu0 0.0
    %359 = vmatprep.subr.mxu0 0.0
    %360 = vmatpush2.msra.mxu0 0.0
    %361 = vmatprep.subr.mxu0 0.0
    %362 = vmatpush2.msra.mxu0 0.0
    %363 = vmatprep.subr.mxu0 0.0
    %364 = vmatpush2.msra.mxu0 0.0
    %365 = vmatprep.subr.mxu0 0.0
    %366 = vmatpush2.msra.mxu0 0.0
    %367 = vmatprep.subr.mxu0 0.0
    %368 = vmatpush2.msra.mxu0 0.0
    %369 = vmatprep.subr.mxu0 0.0
    %370 = vmatpush2.msra.mxu0 0.0
    %371 = vmatprep.subr.mxu0 0.0
    %372 = vmatpush2.msra.mxu0 0.0
    %373 = vmatprep.subr.mxu0 0.0
    %374 = vmatpush2.msra.mxu0 0.0
    %375 = vmatprep.subr.mxu0 0.0
    %376 = vmatpush2.msra.mxu0 0.0
    %377 = vmatprep.subr.mxu0 0.0
    %378 = vmatpush2.msra.mxu0 0.0
    %379 = vmatprep.subr.mxu0 0.0
    %380 = vmatpush2.msra.mxu0 0.0
    %381 = vmatprep.subr.mxu0 0.0
    %382 = vmatpush2.msra.mxu0 0.0
    %383 = vmatprep.subr.mxu0 0.0
    %384 = vmatpush2.msra.mxu0 0.0
    %385 = vmatprep.subr.mxu0 0.0
    %386 = vmatpush2.msra.mxu0 0.0
    %387 = vmatprep.mubr.f32.mxu0 0.0
    %388 = vmatmul.mubr.f32.gmra.mxu0 %v312
    %v389 = vpop.f32.mrf.mxu0
    %v390 = vadd.f32 0.0, %v389
    %v391 = vpop.f32.mrf.mxu0
    %392 = vmatprep.mubr.f32.mxu0 0.0
    %393 = vmatmul.mubr.f32.gmra.mxu0 %v315
    %v394 = vpop.f32.mrf.mxu0
    %v395 = vadd.f32 0.0, %v394
    %v396 = vpop.f32.mrf.mxu0
    %397 = vmatprep.mubr.f32.mxu0 0.0
    %398 = vmatmul.mubr.f32.gmra.mxu0 %v318
    %v399 = vpop.f32.mrf.mxu0
    %v400 = vadd.f32 0.0, %v399
    %v401 = vpop.f32.mrf.mxu0
    %402 = vmatprep.mubr.f32.mxu0 0.0
    %403 = vmatmul.mubr.f32.gmra.mxu0 %v321
    %v404 = vpop.f32.mrf.mxu0
    %v405 = vadd.f32 0.0, %v404
    %v406 = vpop.f32.mrf.mxu0
    %407 = vdwg.mxu0
    %v409 = vsel %vm310, %v162, 0
    %v412 = vsel %vm310, %v163, 0
    %v415 = vsel %vm310, %v164, 0
    %v418 = vsel %vm310, %v165, 0
    %420 = vmatprep.subr.mxu0 0.0
    %421 = vmatpush1.msra.mxu0 0.0
    %422 = vmatprep.subr.mxu0 0.0
    %423 = vmatpush1.msra.mxu0 0.0
    %424 = vmatprep.subr.mxu0 0.0
    %425 = vmatpush1.msra.mxu0 0.0
    %426 = vmatprep.subr.mxu0 0.0
    %427 = vmatpush1.msra.mxu0 0.0
    %428 = vmatprep.subr.mxu0 0.0
    %429 = vmatpush1.msra.mxu0 0.0
    %430 = vmatprep.subr.mxu0 0.0
    %431 = vmatpush1.msra.mxu0 0.0
    %432 = vmatprep.subr.mxu0 0.0
    %433 = vmatpush1.msra.mxu0 0.0
    %434 = vmatprep.subr.mxu0 0.0
    %435 = vmatpush1.msra.mxu0 0.0
    %436 = vmatprep.subr.mxu0 0.0
    %437 = vmatpush1.msra.mxu0 0.0
    %438 = vmatprep.subr.mxu0 0.0
    %439 = vmatpush1.msra.mxu0 0.0
    %440 = vmatprep.subr.mxu0 0.0
    %441 = vmatpush1.msra.mxu0 0.0
    %442 = vmatprep.subr.mxu0 0.0
    %443 = vmatpush1.msra.mxu0 0.0
    %444 = vmatprep.subr.mxu0 0.0
    %445 = vmatpush1.msra.mxu0 %v169
    %446 = vmatprep.subr.mxu0 0.0
    %447 = vmatpush1.msra.mxu0 %v168
    %448 = vmatprep.subr.mxu0 0.0
    %449 = vmatpush1.msra.mxu0 %v167
    %450 = vmatprep.subr.mxu0 0.0
    %451 = vmatpush1.msra.mxu0 %v166
    %452 = vmatprep.subr.mxu0 0.0
    %453 = vmatpush2.msra.mxu0 0.0
    %454 = vmatprep.subr.mxu0 0.0
    %455 = vmatpush2.msra.mxu0 0.0
    %456 = vmatprep.subr.mxu0 0.0
    %457 = vmatpush2.msra.mxu0 0.0
    %458 = vmatprep.subr.mxu0 0.0
    %459 = vmatpush2.msra.mxu0 0.0
    %460 = vmatprep.subr.mxu0 0.0
    %461 = vmatpush2.msra.mxu0 0.0
    %462 = vmatprep.subr.mxu0 0.0
    %463 = vmatpush2.msra.mxu0 0.0
    %464 = vmatprep.subr.mxu0 0.0
    %465 = vmatpush2.msra.mxu0 0.0
    %466 = vmatprep.subr.mxu0 0.0
    %467 = vmatpush2.msra.mxu0 0.0
    %468 = vmatprep.subr.mxu0 0.0
    %469 = vmatpush2.msra.mxu0 0.0
    %470 = vmatprep.subr.mxu0 0.0
    %471 = vmatpush2.msra.mxu0 0.0
    %472 = vmatprep.subr.mxu0 0.0
    %473 = vmatpush2.msra.mxu0 0.0
    %474 = vmatprep.subr.mxu0 0.0
    %475 = vmatpush2.msra.mxu0 0.0
    %476 = vmatprep.subr.mxu0 0.0
    %477 = vmatpush2.msra.mxu0 0.0
    %478 = vmatprep.subr.mxu0 0.0
    %479 = vmatpush2.msra.mxu0 0.0
    %480 = vmatprep.subr.mxu0 0.0
    %481 = vmatpush2.msra.mxu0 0.0
    %482 = vmatprep.subr.mxu0 0.0
    %483 = vmatpush2.msra.mxu0 0.0
    %484 = vmatprep.mubr.f32.mxu0 0.0
    %485 = vmatmul.mubr.f32.gmra.mxu0 %v409
    %v486 = vpop.f32.mrf.mxu0
    %v487 = vadd.f32 %v390, %v486
    %v488 = vpop.f32.mrf.mxu0
    %489 = vmatprep.mubr.f32.mxu0 0.0
    %490 = vmatmul.mubr.f32.gmra.mxu0 %v412
    %v491 = vpop.f32.mrf.mxu0
    %v492 = vadd.f32 %v395, %v491
    %v493 = vpop.f32.mrf.mxu0
    %494 = vmatprep.mubr.f32.mxu0 0.0
    %495 = vmatmul.mubr.f32.gmra.mxu0 %v415
    %v496 = vpop.f32.mrf.mxu0
    %v497 = vadd.f32 %v400, %v496
    %v498 = vpop.f32.mrf.mxu0
    %499 = vmatprep.mubr.f32.mxu0 0.0
    %500 = vmatmul.mubr.f32.gmra.mxu0 %v418
    %v501 = vpop.f32.mrf.mxu0
    %v502 = vadd.f32 %v405, %v501
    %v503 = vpop.f32.mrf.mxu0
    %504 = vdwg.mxu0
    %s505 = scalar_lea.vmem %s1, 258
    %v506 = vld [vmem:[%s505] ss:$2 sm:$0x7f]
    %s507 = scalar_lea.vmem %s0, 2
    %v508 = vld [vmem:[%s507] ss:$2 sm:$0x7f]
    %s509 = scalar_lea.vmem %s0, 18
    %v510 = vld [vmem:[%s509] ss:$2 sm:$0x7f]
    %s511 = scalar_lea.vmem %s0, 34
    %v512 = vld [vmem:[%s511] ss:$2 sm:$0x7f]
    %s513 = scalar_lea.vmem %s0, 50
    %v514 = vld [vmem:[%s513] ss:$2 sm:$0x7f]
    %v516 = vrot.slane %v510, 1
    %v519 = vrot.slane %v512, 2
    %v522 = vrot.slane %v514, 3
    %v524 = vsel %vm41, %v508, %v516
    %v525 = vsel %vm43, %v516, %v519
    %v526 = vsel %vm45, %v519, %v522
    %v528 = vsel %vm51, %v524, 0
    %v531 = vsel %vm51, %v525, 0
    %v534 = vsel %vm51, %v526, 0
    %v536 = vsel %vm51, %v522, 0
    %538 = vmatprep.subr.mxu0 0.0
    %539 = vmatpush1.msra.mxu0 0.0
    %540 = vmatprep.subr.mxu0 0.0
    %541 = vmatpush1.msra.mxu0 0.0
    %542 = vmatprep.subr.mxu0 0.0
    %543 = vmatpush1.msra.mxu0 0.0
    %544 = vmatprep.subr.mxu0 0.0
    %545 = vmatpush1.msra.mxu0 0.0
    %546 = vmatprep.subr.mxu0 0.0
    %547 = vmatpush1.msra.mxu0 0.0
    %548 = vmatprep.subr.mxu0 0.0
    %549 = vmatpush1.msra.mxu0 0.0
    %550 = vmatprep.subr.mxu0 0.0
    %551 = vmatpush1.msra.mxu0 0.0
    %552 = vmatprep.subr.mxu0 0.0
    %553 = vmatpush1.msra.mxu0 0.0
    %554 = vmatprep.subr.mxu0 0.0
    %555 = vmatpush1.msra.mxu0 %v19
    %556 = vmatprep.subr.mxu0 0.0
    %557 = vmatpush1.msra.mxu0 %v18
    %558 = vmatprep.subr.mxu0 0.0
    %559 = vmatpush1.msra.mxu0 %v17
    %560 = vmatprep.subr.mxu0 0.0
    %561 = vmatpush1.msra.mxu0 %v16
    %562 = vmatprep.subr.mxu0 0.0
    %563 = vmatpush1.msra.mxu0 %v15
    %564 = vmatprep.subr.mxu0 0.0
    %565 = vmatpush1.msra.mxu0 %v14
    %566 = vmatprep.subr.mxu0 0.0
    %567 = vmatpush1.msra.mxu0 %v13
    %568 = vmatprep.subr.mxu0 0.0
    %569 = vmatpush1.msra.mxu0 %v12
    %570 = vmatprep.subr.mxu0 0.0
    %571 = vmatpush2.msra.mxu0 0.0
    %572 = vmatprep.subr.mxu0 0.0
    %573 = vmatpush2.msra.mxu0 0.0
    %574 = vmatprep.subr.mxu0 0.0
    %575 = vmatpush2.msra.mxu0 0.0
    %576 = vmatprep.subr.mxu0 0.0
    %577 = vmatpush2.msra.mxu0 0.0
    %578 = vmatprep.subr.mxu0 0.0
    %579 = vmatpush2.msra.mxu0 0.0
    %580 = vmatprep.subr.mxu0 0.0
    %581 = vmatpush2.msra.mxu0 0.0
    %582 = vmatprep.subr.mxu0 0.0
    %583 = vmatpush2.msra.mxu0 0.0
    %584 = vmatprep.subr.mxu0 0.0
    %585 = vmatpush2.msra.mxu0 0.0
    %586 = vmatprep.subr.mxu0 0.0
    %587 = vmatpush2.msra.mxu0 0.0
    %588 = vmatprep.subr.mxu0 0.0
    %589 = vmatpush2.msra.mxu0 0.0
    %590 = vmatprep.subr.mxu0 0.0
    %591 = vmatpush2.msra.mxu0 0.0
    %592 = vmatprep.subr.mxu0 0.0
    %593 = vmatpush2.msra.mxu0 0.0
    %594 = vmatprep.subr.mxu0 0.0
    %595 = vmatpush2.msra.mxu0 0.0
    %596 = vmatprep.subr.mxu0 0.0
    %597 = vmatpush2.msra.mxu0 0.0
    %598 = vmatprep.subr.mxu0 0.0
    %599 = vmatpush2.msra.mxu0 0.0
    %600 = vmatprep.subr.mxu0 0.0
    %601 = vmatpush2.msra.mxu0 0.0
    %602 = vmatprep.mubr.f32.mxu0 0.0
    %603 = vmatmul.mubr.f32.gmra.mxu0 %v528
    %v604 = vpop.f32.mrf.mxu0
    %v605 = vadd.f32 %v50, %v604
    %v606 = vpop.f32.mrf.mxu0
    %607 = vmatprep.mubr.f32.mxu0 0.0
    %608 = vmatmul.mubr.f32.gmra.mxu0 %v531
    %v609 = vpop.f32.mrf.mxu0
    %v610 = vadd.f32 %v50, %v609
    %v611 = vpop.f32.mrf.mxu0
    %612 = vmatprep.mubr.f32.mxu0 0.0
    %613 = vmatmul.mubr.f32.gmra.mxu0 %v534
    %v614 = vpop.f32.mrf.mxu0
    %v615 = vadd.f32 %v50, %v614
    %v616 = vpop.f32.mrf.mxu0
    %617 = vmatprep.mubr.f32.mxu0 0.0
    %618 = vmatmul.mubr.f32.gmra.mxu0 %v536
    %v619 = vpop.f32.mrf.mxu0
    %v620 = vadd.f32 %v50, %v619
    %v621 = vpop.f32.mrf.mxu0
    %622 = vdwg.mxu0
    %v623 = vmax.f32 %v605, 0.0
    %v624 = vmax.f32 %v610, 0.0
    %v625 = vmax.f32 %v615, 0.0
    %v626 = vmax.f32 %v620, 0.0
    %v628 = vrot.slane %v506, 1
    %v630 = vrot.slane %v506, 2
    %v632 = vrot.slane %v506, 3
    %v634 = vsel %vm41, %v506, %v628
    %v635 = vsel %vm43, %v628, %v630
    %v636 = vsel %vm45, %v630, %v632
    %v637 = vadd.f32 %v623, %v634
    %v638 = vadd.f32 %v624, %v635
    %v639 = vadd.f32 %v625, %v636
    %v640 = vadd.f32 %v626, %v632
    %v641 = vld [vmem:[%s1 + $0x80] sm:$0xff]
    %v642 = vld [vmem:[%s1 + $0x88] sm:$0xff]
    %v643 = vld [vmem:[%s1 + $0x90] sm:$0xff]
    %v644 = vld [vmem:[%s1 + $0x98] sm:$0xff]
    %v646 = vsel %vm310, %v637, 0
    %v649 = vsel %vm310, %v638, 0
    %v652 = vsel %vm310, %v639, 0
    %v655 = vsel %vm310, %v640, 0
    %657 = vmatprep.subr.mxu0 0.0
    %658 = vmatpush1.msra.mxu0 0.0
    %659 = vmatprep.subr.mxu0 0.0
    %660 = vmatpush1.msra.mxu0 0.0
    %661 = vmatprep.subr.mxu0 0.0
    %662 = vmatpush1.msra.mxu0 0.0
    %663 = vmatprep.subr.mxu0 0.0
    %664 = vmatpush1.msra.mxu0 0.0
    %665 = vmatprep.subr.mxu0 0.0
    %666 = vmatpush1.msra.mxu0 0.0
    %667 = vmatprep.subr.mxu0 0.0
    %668 = vmatpush1.msra.mxu0 0.0
    %669 = vmatprep.subr.mxu0 0.0
    %670 = vmatpush1.msra.mxu0 0.0
    %671 = vmatprep.subr.mxu0 0.0
    %672 = vmatpush1.msra.mxu0 0.0
    %673 = vmatprep.subr.mxu0 0.0
    %674 = vmatpush1.msra.mxu0 0.0
    %675 = vmatprep.subr.mxu0 0.0
    %676 = vmatpush1.msra.mxu0 0.0
    %677 = vmatprep.subr.mxu0 0.0
    %678 = vmatpush1.msra.mxu0 0.0
    %679 = vmatprep.subr.mxu0 0.0
    %680 = vmatpush1.msra.mxu0 0.0
    %681 = vmatprep.subr.mxu0 0.0
    %682 = vmatpush1.msra.mxu0 %v644
    %683 = vmatprep.subr.mxu0 0.0
    %684 = vmatpush1.msra.mxu0 %v643
    %685 = vmatprep.subr.mxu0 0.0
    %686 = vmatpush1.msra.mxu0 %v642
    %687 = vmatprep.subr.mxu0 0.0
    %688 = vmatpush1.msra.mxu0 %v641
    %689 = vmatprep.subr.mxu0 0.0
    %690 = vmatpush2.msra.mxu0 0.0
    %691 = vmatprep.subr.mxu0 0.0
    %692 = vmatpush2.msra.mxu0 0.0
    %693 = vmatprep.subr.mxu0 0.0
    %694 = vmatpush2.msra.mxu0 0.0
    %695 = vmatprep.subr.mxu0 0.0
    %696 = vmatpush2.msra.mxu0 0.0
    %697 = vmatprep.subr.mxu0 0.0
    %698 = vmatpush2.msra.mxu0 0.0
    %699 = vmatprep.subr.mxu0 0.0
    %700 = vmatpush2.msra.mxu0 0.0
    %701 = vmatprep.subr.mxu0 0.0
    %702 = vmatpush2.msra.mxu0 0.0
    %703 = vmatprep.subr.mxu0 0.0
    %704 = vmatpush2.msra.mxu0 0.0
    %705 = vmatprep.subr.mxu0 0.0
    %706 = vmatpush2.msra.mxu0 0.0
    %707 = vmatprep.subr.mxu0 0.0
    %708 = vmatpush2.msra.mxu0 0.0
    %709 = vmatprep.subr.mxu0 0.0
    %710 = vmatpush2.msra.mxu0 0.0
    %711 = vmatprep.subr.mxu0 0.0
    %712 = vmatpush2.msra.mxu0 0.0
    %713 = vmatprep.subr.mxu0 0.0
    %714 = vmatpush2.msra.mxu0 0.0
    %715 = vmatprep.subr.mxu0 0.0
    %716 = vmatpush2.msra.mxu0 0.0
    %717 = vmatprep.subr.mxu0 0.0
    %718 = vmatpush2.msra.mxu0 0.0
    %719 = vmatprep.subr.mxu0 0.0
    %720 = vmatpush2.msra.mxu0 0.0
    %721 = vmatprep.mubr.f32.mxu0 0.0
    %722 = vmatmul.mubr.f32.gmra.mxu0 %v646
    %v723 = vpop.f32.mrf.mxu0
    %v724 = vadd.f32 0.0, %v723
    %v725 = vpop.f32.mrf.mxu0
    %726 = vmatprep.mubr.f32.mxu0 0.0
    %727 = vmatmul.mubr.f32.gmra.mxu0 %v649
    %v728 = vpop.f32.mrf.mxu0
    %v729 = vadd.f32 0.0, %v728
    %v730 = vpop.f32.mrf.mxu0
    %731 = vmatprep.mubr.f32.mxu0 0.0
    %732 = vmatmul.mubr.f32.gmra.mxu0 %v652
    %v733 = vpop.f32.mrf.mxu0
    %v734 = vadd.f32 0.0, %v733
    %v735 = vpop.f32.mrf.mxu0
    %736 = vmatprep.mubr.f32.mxu0 0.0
    %737 = vmatmul.mubr.f32.gmra.mxu0 %v655
    %v738 = vpop.f32.mrf.mxu0
    %v739 = vadd.f32 0.0, %v738
    %v740 = vpop.f32.mrf.mxu0
    %741 = vdwg.mxu0
    %v742 = vadd.f32 %v487, %v724
    %v743 = vadd.f32 %v492, %v729
    %v744 = vadd.f32 %v497, %v734
    %v745 = vadd.f32 %v502, %v739
    %v746 = vlaneseq
    %v747 = vshrl.u32 %v746, 7
    %v748 = vsub.s32 0, %v747
    %v749 = vrot.slane %v21, %v748
    %v750 = vadd.f32 %v742, %v749
    %v751 = vadd.f32 %v743, %v749
    %v752 = vadd.f32 %v744, %v749
    %v753 = vadd.f32 %v745, %v749
    %v754 = vmax.f32 %v750, 0.0
    %v755 = vmax.f32 %v751, 0.0
    %v756 = vmax.f32 %v752, 0.0
    %v757 = vmax.f32 %v753, 0.0
    %v759 = vrot.slane %v754, 1
    %v761 = vrot.slane %v754, 2
    %v763 = vrot.slane %v754, 4
    %v766 = vrot.slane %v755, 5
    %v768 = vrot.slane %v755, 6
    %v771 = vrot.slane %v756, 1
    %v773 = vrot.slane %v756, 2
    %v775 = vrot.slane %v756, 4
    %v777 = vrot.slane %v756, 5
    %v780 = vrot.slane %v757, 6
    %vm782 = vcmask 1040384
    %v783 = vsel %vm782, %v754, %v759
    %vm784 = vcmask 1041408
    %v785 = vsel %vm784, %v783, %v761
    %vm786 = vcmask 1042432
    %v787 = vsel %vm786, %v785, %v763
    %vm788 = vcmask 1043456
    %v789 = vsel %vm788, %v787, %v766
    %v790 = vsel %vm45, %v789, %v768
    %v791 = vsel %vm43, %v790, %v755
    %v792 = vsel %vm41, %v791, %v771
    %v793 = vsel %vm782, %v773, %v775
    %v794 = vsel %vm784, %v793, %v777
    %v795 = vsel %vm786, %v794, %v780
    %v796 = vld [vmem:[%s1 + $0xa0] sm:$0xff]
    %v797 = vld [vmem:[%s1 + $0xa8] sm:$0xff]
    %v798 = vld [vmem:[%s1 + $0xb0] sm:$0xff]
    %v799 = vld [vmem:[%s1 + $0xb8] sm:$0xff]
    %v800 = vrot.slane %v754, 3
    %v802 = vrot.slane %v755, 7
    %v804 = vrot.slane %v755, 1
    %v806 = vrot.slane %v756, 3
    %v808 = vrot.slane %v757, 7
    %v810 = vsel %vm782, %v759, %v761
    %v811 = vsel %vm784, %v810, %v800
    %v812 = vsel %vm786, %v811, %v766
    %v813 = vsel %vm788, %v812, %v768
    %v814 = vsel %vm45, %v813, %v802
    %v815 = vsel %vm43, %v814, %v804
    %v816 = vsel %vm41, %v815, %v773
    %v817 = vsel %vm782, %v806, %v777
    %v818 = vsel %vm784, %v817, %v780
    %v819 = vsel %vm786, %v818, %v808
    %v820 = vld [vmem:[%s1 + $0xc0] sm:$0xff]
    %v821 = vld [vmem:[%s1 + $0xc8] sm:$0xff]
    %v822 = vld [vmem:[%s1 + $0xd0] sm:$0xff]
    %v823 = vld [vmem:[%s1 + $0xd8] sm:$0xff]
    %v825 = vsel %vm310, %v816, 0
    %v828 = vsel %vm310, %v819, 0
    %830 = vmatprep.subr.mxu0 0.0
    %831 = vmatpush1.msra.mxu0 0.0
    %832 = vmatprep.subr.mxu0 0.0
    %833 = vmatpush1.msra.mxu0 0.0
    %834 = vmatprep.subr.mxu0 0.0
    %835 = vmatpush1.msra.mxu0 0.0
    %836 = vmatprep.subr.mxu0 0.0
    %837 = vmatpush1.msra.mxu0 0.0
    %838 = vmatprep.subr.mxu0 0.0
    %839 = vmatpush1.msra.mxu0 0.0
    %840 = vmatprep.subr.mxu0 0.0
    %841 = vmatpush1.msra.mxu0 0.0
    %842 = vmatprep.subr.mxu0 0.0
    %843 = vmatpush1.msra.mxu0 0.0
    %844 = vmatprep.subr.mxu0 0.0
    %845 = vmatpush1.msra.mxu0 0.0
    %846 = vmatprep.subr.mxu0 0.0
    %847 = vmatpush1.msra.mxu0 0.0
    %848 = vmatprep.subr.mxu0 0.0
    %849 = vmatpush1.msra.mxu0 0.0
    %850 = vmatprep.subr.mxu0 0.0
    %851 = vmatpush1.msra.mxu0 0.0
    %852 = vmatprep.subr.mxu0 0.0
    %853 = vmatpush1.msra.mxu0 0.0
    %854 = vmatprep.subr.mxu0 0.0
    %855 = vmatpush1.msra.mxu0 %v823
    %856 = vmatprep.subr.mxu0 0.0
    %857 = vmatpush1.msra.mxu0 %v822
    %858 = vmatprep.subr.mxu0 0.0
    %859 = vmatpush1.msra.mxu0 %v821
    %860 = vmatprep.subr.mxu0 0.0
    %861 = vmatpush1.msra.mxu0 %v820
    %862 = vmatprep.subr.mxu0 0.0
    %863 = vmatpush2.msra.mxu0 0.0
    %864 = vmatprep.subr.mxu0 0.0
    %865 = vmatpush2.msra.mxu0 0.0
    %866 = vmatprep.subr.mxu0 0.0
    %867 = vmatpush2.msra.mxu0 0.0
    %868 = vmatprep.subr.mxu0 0.0
    %869 = vmatpush2.msra.mxu0 0.0
    %870 = vmatprep.subr.mxu0 0.0
    %871 = vmatpush2.msra.mxu0 0.0
    %872 = vmatprep.subr.mxu0 0.0
    %873 = vmatpush2.msra.mxu0 0.0
    %874 = vmatprep.subr.mxu0 0.0
    %875 = vmatpush2.msra.mxu0 0.0
    %876 = vmatprep.subr.mxu0 0.0
    %877 = vmatpush2.msra.mxu0 0.0
    %878 = vmatprep.subr.mxu0 0.0
    %879 = vmatpush2.msra.mxu0 0.0
    %880 = vmatprep.subr.mxu0 0.0
    %881 = vmatpush2.msra.mxu0 0.0
    %882 = vmatprep.subr.mxu0 0.0
    %883 = vmatpush2.msra.mxu0 0.0
    %884 = vmatprep.subr.mxu0 0.0
    %885 = vmatpush2.msra.mxu0 0.0
    %886 = vmatprep.subr.mxu0 0.0
    %887 = vmatpush2.msra.mxu0 0.0
    %888 = vmatprep.subr.mxu0 0.0
    %889 = vmatpush2.msra.mxu0 0.0
    %890 = vmatprep.subr.mxu0 0.0
    %891 = vmatpush2.msra.mxu0 0.0
    %892 = vmatprep.subr.mxu0 0.0
    %893 = vmatpush2.msra.mxu0 0.0
    %894 = vmatprep.mubr.f32.mxu0 0.0
    %895 = vmatmul.mubr.f32.gmra.mxu0 %v825
    %v896 = vpop.f32.mrf.mxu0
    %v897 = vadd.f32 0.0, %v896
    %v898 = vpop.f32.mrf.mxu0
    %899 = vmatprep.mubr.f32.mxu0 0.0
    %900 = vmatmul.mubr.f32.gmra.mxu0 %v828
    %v901 = vpop.f32.mrf.mxu0
    %v902 = vadd.f32 0.0, %v901
    %v903 = vpop.f32.mrf.mxu0
    %904 = vdwg.mxu0
    %v906 = vsel %vm310, %v792, 0
    %v909 = vsel %vm310, %v795, 0
    %911 = vmatprep.subr.mxu0 0.0
    %912 = vmatpush1.msra.mxu0 0.0
    %913 = vmatprep.subr.mxu0 0.0
    %914 = vmatpush1.msra.mxu0 0.0
    %915 = vmatprep.subr.mxu0 0.0
    %916 = vmatpush1.msra.mxu0 0.0
    %917 = vmatprep.subr.mxu0 0.0
    %918 = vmatpush1.msra.mxu0 0.0
    %919 = vmatprep.subr.mxu0 0.0
    %920 = vmatpush1.msra.mxu0 0.0
    %921 = vmatprep.subr.mxu0 0.0
    %922 = vmatpush1.msra.mxu0 0.0
    %923 = vmatprep.subr.mxu0 0.0
    %924 = vmatpush1.msra.mxu0 0.0
    %925 = vmatprep.subr.mxu0 0.0
    %926 = vmatpush1.msra.mxu0 0.0
    %927 = vmatprep.subr.mxu0 0.0
    %928 = vmatpush1.msra.mxu0 0.0
    %929 = vmatprep.subr.mxu0 0.0
    %930 = vmatpush1.msra.mxu0 0.0
    %931 = vmatprep.subr.mxu0 0.0
    %932 = vmatpush1.msra.mxu0 0.0
    %933 = vmatprep.subr.mxu0 0.0
    %934 = vmatpush1.msra.mxu0 0.0
    %935 = vmatprep.subr.mxu0 0.0
    %936 = vmatpush1.msra.mxu0 %v799
    %937 = vmatprep.subr.mxu0 0.0
    %938 = vmatpush1.msra.mxu0 %v798
    %939 = vmatprep.subr.mxu0 0.0
    %940 = vmatpush1.msra.mxu0 %v797
    %941 = vmatprep.subr.mxu0 0.0
    %942 = vmatpush1.msra.mxu0 %v796
    %943 = vmatprep.subr.mxu0 0.0
    %944 = vmatpush2.msra.mxu0 0.0
    %945 = vmatprep.subr.mxu0 0.0
    %946 = vmatpush2.msra.mxu0 0.0
    %947 = vmatprep.subr.mxu0 0.0
    %948 = vmatpush2.msra.mxu0 0.0
    %949 = vmatprep.subr.mxu0 0.0
    %950 = vmatpush2.msra.mxu0 0.0
    %951 = vmatprep.subr.mxu0 0.0
    %952 = vmatpush2.msra.mxu0 0.0
    %953 = vmatprep.subr.mxu0 0.0
    %954 = vmatpush2.msra.mxu0 0.0
    %955 = vmatprep.subr.mxu0 0.0
    %956 = vmatpush2.msra.mxu0 0.0
    %957 = vmatprep.subr.mxu0 0.0
    %958 = vmatpush2.msra.mxu0 0.0
    %959 = vmatprep.subr.mxu0 0.0
    %960 = vmatpush2.msra.mxu0 0.0
    %961 = vmatprep.subr.mxu0 0.0
    %962 = vmatpush2.msra.mxu0 0.0
    %963 = vmatprep.subr.mxu0 0.0
    %964 = vmatpush2.msra.mxu0 0.0
    %965 = vmatprep.subr.mxu0 0.0
    %966 = vmatpush2.msra.mxu0 0.0
    %967 = vmatprep.subr.mxu0 0.0
    %968 = vmatpush2.msra.mxu0 0.0
    %969 = vmatprep.subr.mxu0 0.0
    %970 = vmatpush2.msra.mxu0 0.0
    %971 = vmatprep.subr.mxu0 0.0
    %972 = vmatpush2.msra.mxu0 0.0
    %973 = vmatprep.subr.mxu0 0.0
    %974 = vmatpush2.msra.mxu0 0.0
    %975 = vmatprep.mubr.f32.mxu0 0.0
    %976 = vmatmul.mubr.f32.gmra.mxu0 %v906
    %v977 = vpop.f32.mrf.mxu0
    %v978 = vadd.f32 %v897, %v977
    %v979 = vpop.f32.mrf.mxu0
    %980 = vmatprep.mubr.f32.mxu0 0.0
    %981 = vmatmul.mubr.f32.gmra.mxu0 %v909
    %v982 = vpop.f32.mrf.mxu0
    %v983 = vadd.f32 %v902, %v982
    %v984 = vpop.f32.mrf.mxu0
    %985 = vdwg.mxu0
    %v986 = vrot.slane %v756, 6
    %v988 = vsel %vm782, %v761, %v800
    %v989 = vsel %vm784, %v988, %v763
    %v990 = vsel %vm786, %v989, %v768
    %v991 = vsel %vm788, %v990, %v802
    %v992 = vsel %vm45, %v991, %v755
    %v993 = vsel %vm43, %v992, %v773
    %v994 = vsel %vm41, %v993, %v806
    %v995 = vsel %vm782, %v775, %v986
    %v996 = vsel %vm784, %v995, %v808
    %v997 = vsel %vm786, %v996, %v757
    %v998 = vld [vmem:[%s1 + $0xe0] sm:$0xff]
    %v999 = vld [vmem:[%s1 + $0xe8] sm:$0xff]
    %v1000 = vld [vmem:[%s1 + $0xf0] sm:$0xff]
    %v1001 = vld [vmem:[%s1 + $0xf8] sm:$0xff]
    %v1003 = vsel %vm310, %v994, 0
    %v1006 = vsel %vm310, %v997, 0
    %1008 = vmatprep.subr.mxu0 0.0
    %1009 = vmatpush1.msra.mxu0 0.0
    %1010 = vmatprep.subr.mxu0 0.0
    %1011 = vmatpush1.msra.mxu0 0.0
    %1012 = vmatprep.subr.mxu0 0.0
    %1013 = vmatpush1.msra.mxu0 0.0
    %1014 = vmatprep.subr.mxu0 0.0
    %1015 = vmatpush1.msra.mxu0 0.0
    %1016 = vmatprep.subr.mxu0 0.0
    %1017 = vmatpush1.msra.mxu0 0.0
    %1018 = vmatprep.subr.mxu0 0.0
    %1019 = vmatpush1.msra.mxu0 0.0
    %1020 = vmatprep.subr.mxu0 0.0
    %1021 = vmatpush1.msra.mxu0 0.0
    %1022 = vmatprep.subr.mxu0 0.0
    %1023 = vmatpush1.msra.mxu0 0.0
    %1024 = vmatprep.subr.mxu0 0.0
    %1025 = vmatpush1.msra.mxu0 0.0
    %1026 = vmatprep.subr.mxu0 0.0
    %1027 = vmatpush1.msra.mxu0 0.0
    %1028 = vmatprep.subr.mxu0 0.0
    %1029 = vmatpush1.msra.mxu0 0.0
    %1030 = vmatprep.subr.mxu0 0.0
    %1031 = vmatpush1.msra.mxu0 0.0
    %1032 = vmatprep.subr.mxu0 0.0
    %1033 = vmatpush1.msra.mxu0 %v1001
    %1034 = vmatprep.subr.mxu0 0.0
    %1035 = vmatpush1.msra.mxu0 %v1000
    %1036 = vmatprep.subr.mxu0 0.0
    %1037 = vmatpush1.msra.mxu0 %v999
    %1038 = vmatprep.subr.mxu0 0.0
    %1039 = vmatpush1.msra.mxu0 %v998
    %1040 = vmatprep.subr.mxu0 0.0
    %1041 = vmatpush2.msra.mxu0 0.0
    %1042 = vmatprep.subr.mxu0 0.0
    %1043 = vmatpush2.msra.mxu0 0.0
    %1044 = vmatprep.subr.mxu0 0.0
    %1045 = vmatpush2.msra.mxu0 0.0
    %1046 = vmatprep.subr.mxu0 0.0
    %1047 = vmatpush2.msra.mxu0 0.0
    %1048 = vmatprep.subr.mxu0 0.0
    %1049 = vmatpush2.msra.mxu0 0.0
    %1050 = vmatprep.subr.mxu0 0.0
    %1051 = vmatpush2.msra.mxu0 0.0
    %1052 = vmatprep.subr.mxu0 0.0
    %1053 = vmatpush2.msra.mxu0 0.0
    %1054 = vmatprep.subr.mxu0 0.0
    %1055 = vmatpush2.msra.mxu0 0.0
    %1056 = vmatprep.subr.mxu0 0.0
    %1057 = vmatpush2.msra.mxu0 0.0
    %1058 = vmatprep.subr.mxu0 0.0
    %1059 = vmatpush2.msra.mxu0 0.0
    %1060 = vmatprep.subr.mxu0 0.0
    %1061 = vmatpush2.msra.mxu0 0.0
    %1062 = vmatprep.subr.mxu0 0.0
    %1063 = vmatpush2.msra.mxu0 0.0
    %1064 = vmatprep.subr.mxu0 0.0
    %1065 = vmatpush2.msra.mxu0 0.0
    %1066 = vmatprep.subr.mxu0 0.0
    %1067 = vmatpush2.msra.mxu0 0.0
    %1068 = vmatprep.subr.mxu0 0.0
    %1069 = vmatpush2.msra.mxu0 0.0
    %1070 = vmatprep.subr.mxu0 0.0
    %1071 = vmatpush2.msra.mxu0 0.0
    %1072 = vmatprep.mubr.f32.mxu0 0.0
    %1073 = vmatmul.mubr.f32.gmra.mxu0 %v1003
    %v1074 = vpop.f32.mrf.mxu0
    %v1075 = vadd.f32 0.0, %v1074
    %v1076 = vpop.f32.mrf.mxu0
    %1077 = vmatprep.mubr.f32.mxu0 0.0
    %1078 = vmatmul.mubr.f32.gmra.mxu0 %v1006
    %v1079 = vpop.f32.mrf.mxu0
    %v1080 = vadd.f32 0.0, %v1079
    %v1081 = vpop.f32.mrf.mxu0
    %1082 = vdwg.mxu0
    %v1083 = vadd.f32 %v978, %v1075
    %v1084 = vadd.f32 %v983, %v1080
    %v1085 = vlaneseq
    %v1086 = vshrl.u32 %v1085, 7
    %v1087 = vsub.s32 0, %v1086
    %v1088 = vrot.slane %v22, %v1087
    %v1089 = vadd.f32 %v1083, %v1088
    %v1090 = vadd.f32 %v1084, %v1088
    %v1091 = vmax.f32 %v1089, 0.0
    %v1092 = vmax.f32 %v1090, 0.0
    %1093 = vst.msk [vmem:[#allocation2] sm:$0xff] %vm310, %v1091
    %vm1094 = vcmask 257024
    %1095 = vst.msk [vmem:[#allocation2 + $0x8] sm:$0xf] %vm1094, %v1092
    // Predicated region
    $region10: #{tpu_custom_call.1} parent=1 // pred_check
      _
    $region11: #{tpu_custom_call.1} parent=1 // pred_check_branch
      %1097 = sbr.rel (0) target = $region13
    $region12: #{tpu_custom_call.1} parent=1 // pred_region
      %s1099 = ssub.s32 256, 256
      %1100 = vsyncadd [#allocation3], %s1099
      %s1101 = sshll.u32 [#allocation2], 4
      %s1102 = int_to_ptr.vmem [resolvable:$true] %s1101
      %1107 = dma.vmem_to_hbm [thread:$0]  %s1102, 256, %s2, [#allocation3], 128, 128, 8
    $region13: #{tpu_custom_call.1} parent=1 // pred_fallthru
      _
    // Predicated region
    $region14: #{tpu_custom_call.1} parent=1 // pred_check
      _
    $region15: #{tpu_custom_call.1} parent=1 // pred_check_branch
      %1109 = sbr.rel (0) target = $region17
    $region16: #{tpu_custom_call.1} parent=1 // pred_region
      %1110 = dma.done [#allocation3], 256
    $region17: #{tpu_custom_call.1} parent=1 // pred_fallthru
      _
    %1111 = vsyncpa [#allocation3], 1

</llo_original>
